<compile_context>
chip_gen: v7x
topology: tpu7x:2x2x1
jax: 0.10.0
libtpu: 0.0.40
codegen_flags: <defaults>
</compile_context>

<pallas_src>
import jax
import jax.numpy as jnp
from jax import lax
from jax.experimental import pallas as pl
from jax.experimental.pallas import tpu as pltpu


def _round_up(x, m):
    return ((x + m - 1) // m) * m


def _maybe_vmem_limit(est_bytes):
    # Only raise the scoped-VMEM cap when the kernel needs more than the
    # smallest per-generation default (v5e: 16 MiB); stay well under v7x's
    # 64 MiB physical VMEM.
    if est_bytes <= (12 << 20):
        return None
    return int(min(est_bytes + (8 << 20), 48 << 20))


# -----------------------------------------------------------------------------
# Path A ("onehot"): small vocabularies.  Tables resident in VMEM, gather via a
# one-hot MXU matmul, lane-dense (1, TB) output.
# -----------------------------------------------------------------------------
def _rec_onehot_kernel(uid_ref, mid_ref,      # (1, TB) int32 id tiles (VMEM)
                       ut_ref, mt_ref,        # (E, NU) / (E, NM) tables, resident
                       w_ref, b_ref,          # (E, 2) fc weight, (1, 1) bias
                       out_ref):              # (1, TB) lane-dense output tile
    nu = ut_ref.shape[1]
    nm = mt_ref.shape[1]
    tb = uid_ref.shape[1]

    uid = uid_ref[...]                                    # (1, TB)
    mid = mid_ref[...]

    # One-hot selection matrices built directly in the transposed layout the
    # MXU wants: row v of oh_u marks which batch elements want user v.
    oh_u = (lax.broadcasted_iota(jnp.int32, (nu, tb), 0) == uid).astype(jnp.float32)
    oh_m = (lax.broadcasted_iota(jnp.int32, (nm, tb), 0) == mid).astype(jnp.float32)

    # Gather == matmul with a one-hot: (E, NU) @ (NU, TB) -> (E, TB).
    u_et = jnp.dot(ut_ref[...], oh_u, preferred_element_type=jnp.float32)
    m_et = jnp.dot(mt_ref[...], oh_m, preferred_element_type=jnp.float32)

    # fc over concat([user, movie]) realised as a weight split: VPU mul +
    # one sublane reduce; the result is already a lane-dense (1, TB) row.
    acc = u_et * w_ref[:, 0:1] + m_et * w_ref[:, 1:2]     # (E, TB)
    pred = jnp.sum(acc, axis=0, keepdims=True) + b_ref[...]
    out_ref[...] = pred.astype(out_ref.dtype)


def _forward_onehot(uids, mids, user_tab, movie_tab, w2, bias, tb, b_pad):
    nu, E = user_tab.shape
    nm = movie_tab.shape[0]
    n_tiles = b_pad // tb

    # Layout plumbing only: feature-major tables / weight keep the in-kernel
    # compute and the output slab lane-dense.
    ut_t = user_tab.T                     # (E, NU)
    mt_t = movie_tab.T                    # (E, NM)
    w_t = w2.T                            # (E, 2)
    uids_row = uids.reshape(1, b_pad)
    mids_row = mids.reshape(1, b_pad)

    est = 2 * (nu + nm) * E * 4 + 3 * tb * (nu + nm) * 4 + 4 * tb * E * 4

    out = pl.pallas_call(
        _rec_onehot_kernel,
        grid=(n_tiles,),
        in_specs=[
            pl.BlockSpec((1, tb), lambda i: (0, i)),
            pl.BlockSpec((1, tb), lambda i: (0, i)),
            pl.BlockSpec((E, nu), lambda i: (0, 0)),      # resident table
            pl.BlockSpec((E, nm), lambda i: (0, 0)),      # resident table
            pl.BlockSpec((E, 2), lambda i: (0, 0)),       # resident fc weight
            pl.BlockSpec((1, 1), lambda i: (0, 0)),       # resident bias
        ],
        out_specs=pl.BlockSpec((1, tb), lambda i: (0, i)),
        out_shape=jax.ShapeDtypeStruct((1, b_pad), jnp.float32),
        compiler_params=pltpu.CompilerParams(
            dimension_semantics=("parallel",),            # both v7x TCs get tiles
            vmem_limit_bytes=_maybe_vmem_limit(est)),
    )(uids_row, mids_row, ut_t, mt_t, w_t, bias)
    return out[0]                                         # (b_pad,)


# -----------------------------------------------------------------------------
# Path B ("gather"): large vocabularies.  Tables stay in HBM; rows are gathered
# with manual DMAs, double-buffered across grid steps, with one aggregate wait
# per table per tile.
# -----------------------------------------------------------------------------
def _rec_gather_kernel(uid_ref, mid_ref,        # scalar prefetch (SMEM), (B_pad,)
                       user_hbm, movie_hbm,     # full tables, left in HBM (pl.ANY)
                       w_ref, b_ref,            # (2, E) fc weight, (1, 1) bias
                       out_ref,                 # (TB, 1) output tile
                       u_buf, m_buf, sem):      # (2, TB, E) x2 buffers, DMA sems (2, 2)
    i = pl.program_id(0)
    n = pl.num_programs(0)
    tb = u_buf.shape[1]
    slot = i % 2

    def issue_tile(tile, slot_):
        base = tile * tb

        def body(r, carry):
            uid = uid_ref[base + r]
            mid = mid_ref[base + r]
            pltpu.make_async_copy(user_hbm.at[pl.ds(uid, 1)],
                                  u_buf.at[slot_, pl.ds(r, 1)],
                                  sem.at[0, slot_]).start()
            pltpu.make_async_copy(movie_hbm.at[pl.ds(mid, 1)],
                                  m_buf.at[slot_, pl.ds(r, 1)],
                                  sem.at[1, slot_]).start()
            return carry

        # Unrolled issue loop: the gather is descriptor-issue bound.
        # TODO(synk): skip row DMAs (and shrink the matching wait) for padded
        # rows in the ragged last tile.
        lax.fori_loop(0, tb, body, 0, unroll=8)

    # Prime the pipeline on the first grid step, then keep the NEXT tile's
    # gather in flight while computing the current one (cross-tile prefetch).
    @pl.when(i == 0)
    def _():
        issue_tile(i, slot)

    @pl.when(i + 1 < n)
    def _():
        issue_tile(i + 1, 1 - slot)

    # One aggregate wait per table: DMA semaphores count bytes, so a single
    # (TB, E) descriptor absorbs all TB row copies issued for this tile.
    pltpu.make_async_copy(u_buf.at[slot], u_buf.at[slot], sem.at[0, slot]).wait()
    pltpu.make_async_copy(m_buf.at[slot], m_buf.at[slot], sem.at[1, slot]).wait()

    # fc over the tile on the VPU (concat realised by the weight split);
    # the (TB, 1) store is negligible next to the gather traffic.
    acc = u_buf[slot] * w_ref[0:1, :] + m_buf[slot] * w_ref[1:2, :]    # (TB, E)
    pred = jnp.sum(acc, axis=-1, keepdims=True) + b_ref[...]           # (TB, 1)
    out_ref[...] = pred.astype(out_ref.dtype)


def _forward_gather(uids, mids, user_tab, movie_tab, w2, bias, tb, b_pad):
    E = user_tab.shape[1]
    n_tiles = b_pad // tb

    grid_spec = pltpu.PrefetchScalarGridSpec(
        num_scalar_prefetch=2,                       # ids -> SMEM before the grid
        grid=(n_tiles,),
        in_specs=[
            pl.BlockSpec(memory_space=pl.ANY),       # user table stays in HBM
            pl.BlockSpec(memory_space=pl.ANY),       # movie table stays in HBM
            pl.BlockSpec((2, E), lambda i, u, m: (0, 0)),
            pl.BlockSpec((1, 1), lambda i, u, m: (0, 0)),
        ],
        out_specs=pl.BlockSpec((tb, 1), lambda i, u, m: (i, 0)),
        scratch_shapes=[
            pltpu.VMEM((2, tb, E), jnp.float32),     # user rows, double-buffered
            pltpu.VMEM((2, tb, E), jnp.float32),     # movie rows, double-buffered
            pltpu.SemaphoreType.DMA((2, 2)),         # [table, slot]
        ],
    )

    est = 4 * tb * E * 4 + 4 * E * 4 + 2 * tb * 4

    out = pl.pallas_call(
        _rec_gather_kernel,
        grid_spec=grid_spec,
        out_shape=jax.ShapeDtypeStruct((b_pad, 1), jnp.float32),
        compiler_params=pltpu.CompilerParams(
            # "arbitrary": the cross-tile prefetch hands DMA buffers from step
            # i to step i+1, so the grid must run sequentially on one core.
            dimension_semantics=("arbitrary",),
            vmem_limit_bytes=_maybe_vmem_limit(est)),
    )(uids, mids, user_tab, movie_tab, w2, bias)
    return out[:, 0]                                  # (b_pad,)


# -----------------------------------------------------------------------------
# Public wrapper
# -----------------------------------------------------------------------------
def recommendation_forward(user_ids, movie_ids, params, *, tile_b=1024,
                           force_path=None):
    user_tab = params["user_embedding"].astype(jnp.float32)    # (num_users,  E)
    movie_tab = params["movie_embedding"].astype(jnp.float32)  # (num_movies, E)
    w = params["fc_w"].astype(jnp.float32)                     # (1, 2E)
    bias = params["fc_b"].astype(jnp.float32).reshape(1, 1)    # (1, 1)

    nu, E = user_tab.shape
    nm = movie_tab.shape[0]
    B = int(user_ids.shape[0])

    # Path choice: tiny vocabularies keep the tables resident in VMEM and
    # gather with a one-hot MXU matmul; otherwise gather rows from HBM.
    onehot_ok = (nu + nm) <= 2048 and (nu + nm) * E * 4 <= (8 << 20)
    path = force_path if force_path is not None else ("onehot" if onehot_ok else "gather")
    if path not in ("onehot", "gather"):
        raise ValueError(f"unknown path {path!r}")

    # Batch tiling: lane-dense tiles (multiples of 128); a big default tile
    # amortizes the ~0.35us per-grid-step overhead, capped so v7x's two
    # TensorCores both get work once the padded batch spans >= 2 tiles.
    b128 = _round_up(max(B, 1), 128)
    tb = min(int(tile_b), b128)
    if b128 >= 256:
        tb = min(tb, b128 // 2)
    if path == "gather":
        # Keep the double-buffered gather scratch modest (fits v7x's 64 MiB).
        while tb > 128 and 4 * tb * E * 4 > (24 << 20):
            tb //= 2
    tb = max(128, (tb // 128) * 128)
    b_pad = _round_up(b128, tb)

    # Clamp ids (an out-of-range id must never become an OOB DMA / gather
    # source) and pad the batch with id 0 up to the tile boundary.
    uids = jnp.clip(user_ids.astype(jnp.int32), 0, nu - 1)
    mids = jnp.clip(movie_ids.astype(jnp.int32), 0, nm - 1)
    if b_pad != B:
        uids = jnp.pad(uids, (0, b_pad - B))
        mids = jnp.pad(mids, (0, b_pad - B))

    w2 = w.reshape(2, E)   # row 0: user half of fc weight, row 1: movie half

    if path == "onehot":
        flat = _forward_onehot(uids, mids, user_tab, movie_tab, w2, bias, tb, b_pad)
    else:
        flat = _forward_gather(uids, mids, user_tab, movie_tab, w2, bias, tb, b_pad)

    preds = flat[:B]
    # torch `.squeeze()` returns a 0-d tensor when B == 1.
    return preds.reshape(()) if B == 1 else preds


# -----------------------------------------------------------------------------
# Parameter init (matches torch defaults) and pure-JAX reference
# -----------------------------------------------------------------------------
def init_params(key, num_users, num_movies, embedding_size):
    k1, k2, k3, k4 = jax.random.split(key, 4)
    fan_in = 2 * embedding_size
    bound = 1.0 / float(jnp.sqrt(fan_in))
    return {
        # nn.Embedding default: N(0, 1)
        "user_embedding": jax.random.normal(
            k1, (num_users, embedding_size), jnp.float32),
        "movie_embedding": jax.random.normal(
            k2, (num_movies, embedding_size), jnp.float32),
        # nn.Linear default: U(-1/sqrt(fan_in), 1/sqrt(fan_in))
        "fc_w": jax.random.uniform(
            k3, (1, 2 * embedding_size), jnp.float32, -bound, bound),
        "fc_b": jax.random.uniform(k4, (1,), jnp.float32, -bound, bound),
    }


def reference_forward(user_ids, movie_ids, params):
    ue = params["user_embedding"][user_ids]
    me = params["movie_embedding"][movie_ids]
    x = jnp.concatenate([ue, me], axis=1)
    return (x @ params["fc_w"].T + params["fc_b"])[:, 0]


if __name__ == "__main__":
    key = jax.random.PRNGKey(0)

    # --- Test 1: small vocab -> resident-VMEM one-hot path (the demo config) ---
    num_users, num_movies, embedding_size, batch = 64, 128, 32, 8
    kp, ku, km, key = jax.random.split(key, 4)
    params = init_params(kp, num_users, num_movies, embedding_size)
    user_ids = jax.random.randint(ku, (batch,), 0, num_users, dtype=jnp.int32)
    movie_ids = jax.random.randint(km, (batch,), 0, num_movies, dtype=jnp.int32)

    preds = jax.block_until_ready(recommendation_forward(user_ids, movie_ids, params))
    ref = reference_forward(user_ids, movie_ids, params)
    assert preds.shape == (batch,), preds.shape
    assert jnp.allclose(preds, ref, atol=1e-5, rtol=1e-5), (preds, ref)

    # --- Test 2: bigger vocab -> HBM row-gather path (manual, pipelined DMAs) ---
    num_users, num_movies, embedding_size, batch = 512, 640, 128, 300
    kp, ku, km, key = jax.random.split(key, 4)
    params = init_params(kp, num_users, num_movies, embedding_size)
    user_ids = jax.random.randint(ku, (batch,), 0, num_users, dtype=jnp.int32)
    movie_ids = jax.random.randint(km, (batch,), 0, num_movies, dtype=jnp.int32)

    preds = jax.block_until_ready(
        recommendation_forward(user_ids, movie_ids, params, force_path="gather"))
    ref = reference_forward(user_ids, movie_ids, params)
    assert preds.shape == (batch,), preds.shape
    assert jnp.allclose(preds, ref, atol=1e-4, rtol=1e-4), (preds, ref)

    print("KERNEL_OK")
</pallas_src>

<mosaic_0001>
module attributes {stable_mosaic.version = 11 : i64} {
  func.func @_rec_onehot_kernel(%arg0: i32, %arg1: memref<1x128xi32, #tpu.memory_space<vmem>>, %arg2: memref<1x128xi32, #tpu.memory_space<vmem>>, %arg3: memref<32x64xf32, #tpu.memory_space<vmem>>, %arg4: memref<32x128xf32, #tpu.memory_space<vmem>>, %arg5: memref<32x2xf32, #tpu.memory_space<vmem>>, %arg6: memref<1x1xf32, #tpu.memory_space<vmem>>, %arg7: memref<1x128xf32, #tpu.memory_space<vmem>>) attributes {dimension_semantics = [#tpu.dimension_semantics<parallel>], iteration_bounds = array<i64: 1>, scalar_prefetch = 0 : i64, scratch_operands = 0 : i64, tpu.core_type = #tpu.core_type<tc>, window_params = [{transform_indices = @transform_0, window_bounds = array<i64: 1, 128>}, {transform_indices = @transform_1, window_bounds = array<i64: 1, 128>}, {pipeline_mode = #tpu.pipeline_mode<synchronous>, transform_indices = @transform_2, window_bounds = array<i64: 32, 64>}, {pipeline_mode = #tpu.pipeline_mode<synchronous>, transform_indices = @transform_3, window_bounds = array<i64: 32, 128>}, {pipeline_mode = #tpu.pipeline_mode<synchronous>, transform_indices = @transform_4, window_bounds = array<i64: 32, 2>}, {pipeline_mode = #tpu.pipeline_mode<synchronous>, transform_indices = @transform_5, window_bounds = array<i64: 1, 1>}, {transform_indices = @transform_6, window_bounds = array<i64: 1, 128>}]} {
    %c0 = arith.constant 0 : index
    %c0_0 = arith.constant 0 : index
    %0 = vector.load %arg1[%c0, %c0_0] : memref<1x128xi32, #tpu.memory_space<vmem>>, vector<1x128xi32>
    %c0_1 = arith.constant 0 : index
    %c0_2 = arith.constant 0 : index
    %1 = vector.load %arg2[%c0_1, %c0_2] : memref<1x128xi32, #tpu.memory_space<vmem>>, vector<1x128xi32>
    %2 = tpu.iota {dimensions = array<i32: 0>} : vector<64x128xi32>
    %3 = vector.broadcast %0 : vector<1x128xi32> to vector<64x128xi32>
    %4 = arith.cmpi eq, %2, %3 : vector<64x128xi32>
    %5 = arith.extui %4 : vector<64x128xi1> to vector<64x128xi32>
    %6 = arith.sitofp %5 : vector<64x128xi32> to vector<64x128xf32>
    %7 = tpu.iota {dimensions = array<i32: 0>} : vector<128x128xi32>
    %8 = vector.broadcast %1 : vector<1x128xi32> to vector<128x128xi32>
    %9 = arith.cmpi eq, %7, %8 : vector<128x128xi32>
    %10 = arith.extui %9 : vector<128x128xi1> to vector<128x128xi32>
    %11 = arith.sitofp %10 : vector<128x128xi32> to vector<128x128xf32>
    %c0_3 = arith.constant 0 : index
    %c0_4 = arith.constant 0 : index
    %12 = vector.load %arg3[%c0_3, %c0_4] : memref<32x64xf32, #tpu.memory_space<vmem>>, vector<32x64xf32>
    %cst = arith.constant dense<0.000000e+00> : vector<32x128xf32>
    %13 = tpu.matmul %12, %6, %cst {dimension_numbers = #tpu.dot_dimension_numbers<[1], [0], [0], [1], [0, 0, 1, 1], [], []>} : vector<32x64xf32>, vector<64x128xf32>, vector<32x128xf32> -> vector<32x128xf32>
    %c0_5 = arith.constant 0 : index
    %c0_6 = arith.constant 0 : index
    %14 = vector.load %arg4[%c0_5, %c0_6] : memref<32x128xf32, #tpu.memory_space<vmem>>, vector<32x128xf32>
    %cst_7 = arith.constant dense<0.000000e+00> : vector<32x128xf32>
    %15 = tpu.matmul %14, %11, %cst_7 {dimension_numbers = #tpu.dot_dimension_numbers<[1], [0], [0], [1], [0, 0, 1, 1], [], []>} : vector<32x128xf32>, vector<128x128xf32>, vector<32x128xf32> -> vector<32x128xf32>
    %c0_8 = arith.constant 0 : index
    %c0_9 = arith.constant 0 : index
    %16 = vector.load %arg5[%c0_8, %c0_9] : memref<32x2xf32, #tpu.memory_space<vmem>>, vector<32x1xf32>
    %17 = vector.broadcast %16 : vector<32x1xf32> to vector<32x128xf32>
    %18 = arith.mulf %13, %17 : vector<32x128xf32>
    %c0_10 = arith.constant 0 : index
    %c1 = arith.constant 1 : index
    %19 = vector.load %arg5[%c0_10, %c1] : memref<32x2xf32, #tpu.memory_space<vmem>>, vector<32x1xf32>
    %20 = vector.broadcast %19 : vector<32x1xf32> to vector<32x128xf32>
    %21 = arith.mulf %15, %20 : vector<32x128xf32>
    %22 = arith.addf %18, %21 : vector<32x128xf32>
    %cst_11 = arith.constant dense<0.000000e+00> : vector<128xf32>
    %23 = vector.multi_reduction <add>, %22, %cst_11 [0] : vector<32x128xf32> to vector<128xf32>
    %24 = vector.shape_cast %23 : vector<128xf32> to vector<1x128xf32>
    %c0_12 = arith.constant 0 : index
    %c0_13 = arith.constant 0 : index
    %25 = vector.load %arg6[%c0_12, %c0_13] : memref<1x1xf32, #tpu.memory_space<vmem>>, vector<1x1xf32>
    %26 = vector.broadcast %25 : vector<1x1xf32> to vector<1x128xf32>
    %27 = arith.addf %24, %26 : vector<1x128xf32>
    %c0_14 = arith.constant 0 : index
    %c0_15 = arith.constant 0 : index
    %28 = vector.load %arg7[%c0_14, %c0_15] : memref<1x128xf32, #tpu.memory_space<vmem>>, vector<1x128xf32>
    tpu.vector_store %arg7[%c0_14, %c0_15], %27 {strides = array<i32>} : memref<1x128xf32, #tpu.memory_space<vmem>>, vector<1x128xf32>,
    return
  }
  func.func @transform_0(%arg0: i32) -> (i32, i32) {
    %c0_i32 = arith.constant 0 : i32
    %c0_i32_0 = arith.constant 0 : i32
    return %c0_i32, %arg0 : i32, i32
  }
  func.func @transform_1(%arg0: i32) -> (i32, i32) {
    %c0_i32 = arith.constant 0 : i32
    %c0_i32_0 = arith.constant 0 : i32
    return %c0_i32, %arg0 : i32, i32
  }
  func.func @transform_2(%arg0: i32) -> (i32, i32) {
    %c0_i32 = arith.constant 0 : i32
    %c0_i32_0 = arith.constant 0 : i32
    %c0_i32_1 = arith.constant 0 : i32
    return %c0_i32, %c0_i32_0 : i32, i32
  }
  func.func @transform_3(%arg0: i32) -> (i32, i32) {
    %c0_i32 = arith.constant 0 : i32
    %c0_i32_0 = arith.constant 0 : i32
    %c0_i32_1 = arith.constant 0 : i32
    return %c0_i32, %c0_i32_0 : i32, i32
  }
  func.func @transform_4(%arg0: i32) -> (i32, i32) {
    %c0_i32 = arith.constant 0 : i32
    %c0_i32_0 = arith.constant 0 : i32
    %c0_i32_1 = arith.constant 0 : i32
    return %c0_i32, %c0_i32_0 : i32, i32
  }
  func.func @transform_5(%arg0: i32) -> (i32, i32) {
    %c0_i32 = arith.constant 0 : i32
    %c0_i32_0 = arith.constant 0 : i32
    %c0_i32_1 = arith.constant 0 : i32
    return %c0_i32, %c0_i32_0 : i32, i32
  }
  func.func @transform_6(%arg0: i32) -> (i32, i32) {
    %c0_i32 = arith.constant 0 : i32
    %c0_i32_0 = arith.constant 0 : i32
    return %c0_i32, %arg0 : i32, i32
  }
}

</mosaic_0001>

<llo_original>
// kernel: tpu_custom_call.1
$region0: #{tpu_custom_call.1}
  #allocation0 [shape = 'u32[]', space=smem, size = 0x4, offset = 0x4, fixed_abs, tag = 'smem constant byte address 0x4 - core index']
  #allocation1 [shape = 'u32[144,128]{1,0:T(1,128)}', space=vmem, size = 0x12000, scoped, tag = 'internal scratch']
  #allocation2 [shape = 'f32[1,1]{1,0:T(1,128)S(1)}', space=vmem, size = 0x200, scoped, tag = 'scoped memory for tpu_custom_call.1']
  %s0 = inlined_call_operand.vmem [shape: s32[1,128], index: 0, kind: input, shape index: {}]
  %s1 = inlined_call_operand.vmem [shape: s32[1,128], index: 1, kind: input, shape index: {}]
  %s2 = inlined_call_operand.vmem [shape: f32[32,64], index: 2, kind: input, shape index: {}]
  %s3 = inlined_call_operand.hbm [shape: f32[32,128], index: 3, kind: input, shape index: {}]
  %s4 = inlined_call_operand.vmem [shape: f32[32,2], index: 4, kind: input, shape index: {}]
  %s5 = inlined_call_operand.<no memory space> [shape: f32[1,1], index: 5, kind: input, shape index: {}]
  %s6 = inlined_call_operand.hbm [shape: f32[1,128], index: 6, kind: output, shape index: {}]
  %s7 = sld [smem:[#allocation0]]
  $region38: #{tpu_custom_call.1} parent=0
    _
  %s9 = ssub.s32 1, %s7
  %s10 = scalar_select 0, %s9, %s7
  %v11 = vstv %s5
  %12 = vst [vmem:[#allocation2] sm:$0x1] %v11
  $region1: #{tpu_custom_call.1} parent=0
    #allocation3 [shape = 'u8[16384]{0}', space=vmem, size = 0x4000, scoped, tag = 'input window, operand 3, single buffered']
    #allocation4 [shape = 's32[1]{0}', space=sflag, size = 0x4, scoped, tag = 'scoped memory for tpu_custom_call.1']
    #allocation5 [shape = 's32[1]{0}', space=sflag, size = 0x4, scoped, tag = 'scoped memory for tpu_custom_call.1']
    #allocation6 [shape = 'u8[512]{0}', space=vmem, size = 0x400, scoped, tag = 'output window, operand 0, single buffered']
    %13 = vsyncpa [#allocation4], 0
    %14 = vsyncpa [#allocation5], 0
    // Predicated region
    $region2: #{tpu_custom_call.1} parent=1 // pred_check
      _
    $region3: #{tpu_custom_call.1} parent=1 // pred_check_branch
      %16 = sbr.rel (0) target = $region5
    $region4: #{tpu_custom_call.1} parent=1 // pred_region
      _
    $region5: #{tpu_custom_call.1} parent=1 // pred_fallthru
      _
    // Predicated region
    $region6: #{tpu_custom_call.1} parent=1 // pred_check
      _
    $region7: #{tpu_custom_call.1} parent=1 // pred_check_branch
      %18 = sbr.rel (0) target = $region9
    $region8: #{tpu_custom_call.1} parent=1 // pred_region
      _
    $region9: #{tpu_custom_call.1} parent=1 // pred_fallthru
      _
    // Predicated region
    $region10: #{tpu_custom_call.1} parent=1 // pred_check
      _
    $region11: #{tpu_custom_call.1} parent=1 // pred_check_branch
      %20 = sbr.rel (0) target = $region13
    $region12: #{tpu_custom_call.1} parent=1 // pred_region
      _
    $region13: #{tpu_custom_call.1} parent=1 // pred_fallthru
      _
    // Predicated region
    $region14: #{tpu_custom_call.1} parent=1 // pred_check
      _
    $region15: #{tpu_custom_call.1} parent=1 // pred_check_branch
      %22 = sbr.rel (0) target = $region17
    $region16: #{tpu_custom_call.1} parent=1 // pred_region
      %s24 = ssub.s32 512, 512
      %25 = vsyncadd [#allocation4], %s24
      %s26 = sshll.u32 [#allocation3], 4
      %s27 = int_to_ptr.vmem [resolvable:$true] %s26
      %32 = dma.hbm_to_vmem [thread:$0]  %s3, 512, %s27, [#allocation4], 128, 128, 8
    $region17: #{tpu_custom_call.1} parent=1 // pred_fallthru
      _
    // Predicated region
    $region18: #{tpu_custom_call.1} parent=1 // pred_check
      _
    $region19: #{tpu_custom_call.1} parent=1 // pred_check_branch
      %34 = sbr.rel (0) target = $region21
    $region20: #{tpu_custom_call.1} parent=1 // pred_region
      _
    $region21: #{tpu_custom_call.1} parent=1 // pred_fallthru
      _
    // Predicated region
    $region22: #{tpu_custom_call.1} parent=1 // pred_check
      _
    $region23: #{tpu_custom_call.1} parent=1 // pred_check_branch
      %36 = sbr.rel (0) target = $region25
    $region24: #{tpu_custom_call.1} parent=1 // pred_region
      _
    $region25: #{tpu_custom_call.1} parent=1 // pred_fallthru
      _
    // Predicated region
    $region26: #{tpu_custom_call.1} parent=1 // pred_check
      _
    $region27: #{tpu_custom_call.1} parent=1 // pred_check_branch
      %38 = sbr.rel (0) target = $region29
    $region28: #{tpu_custom_call.1} parent=1 // pred_region
      %39 = dma.done [#allocation4], 512
    $region29: #{tpu_custom_call.1} parent=1 // pred_fallthru
      _
    %v40 = vld [vmem:[%s0] sm:$0x1]
    %v41 = vld [vmem:[%s1] sm:$0x1]
    %v42 = vlaneseq
    %v43 = vshrl.u32 %v42, 7
    %v44 = vadd.s32 %v43, 8
    %v45 = vadd.s32 %v43, 16
    %v46 = vadd.s32 %v43, 24
    %v47 = vadd.s32 %v43, 32
    %v48 = vadd.s32 %v43, 40
    %v49 = vadd.s32 %v43, 48
    %v50 = vadd.s32 %v43, 56
    %v51 = vlaneseq
    %v52 = vshrl.u32 %v51, 7
    %v53 = vsub.s32 0, %v52
    %v54 = vrot.slane %v40, %v53
    %vm55 = vcmp.eq.s32.totalorder %v43, %v54
    %vm56 = vcmp.eq.s32.totalorder %v44, %v54
    %vm57 = vcmp.eq.s32.totalorder %v45, %v54
    %vm58 = vcmp.eq.s32.totalorder %v46, %v54
    %vm59 = vcmp.eq.s32.totalorder %v47, %v54
    %vm60 = vcmp.eq.s32.totalorder %v48, %v54
    %vm61 = vcmp.eq.s32.totalorder %v49, %v54
    %vm62 = vcmp.eq.s32.totalorder %v50, %v54
    %v63 = vsel %vm55, 1, 0
    %v64 = vsel %vm56, 1, 0
    %v65 = vsel %vm57, 1, 0
    %v66 = vsel %vm58, 1, 0
    %v67 = vsel %vm59, 1, 0
    %v68 = vsel %vm60, 1, 0
    %v69 = vsel %vm61, 1, 0
    %v70 = vsel %vm62, 1, 0
    %v71 = vcvt.s32.f32 %v63
    %v72 = vcvt.s32.f32 %v64
    %v73 = vcvt.s32.f32 %v65
    %v74 = vcvt.s32.f32 %v66
    %v75 = vcvt.s32.f32 %v67
    %v76 = vcvt.s32.f32 %v68
    %v77 = vcvt.s32.f32 %v69
    %v78 = vcvt.s32.f32 %v70
    %v79 = vadd.s32 %v43, 64
    %v80 = vadd.s32 %v43, 72
    %v81 = vadd.s32 %v43, 80
    %v82 = vadd.s32 %v43, 88
    %v83 = vadd.s32 %v43, 96
    %v84 = vadd.s32 %v43, 104
    %v85 = vadd.s32 %v43, 112
    %v86 = vadd.s32 %v43, 120
    %v87 = vlaneseq
    %v88 = vshrl.u32 %v87, 7
    %v89 = vsub.s32 0, %v88
    %v90 = vrot.slane %v41, %v89
    %vm91 = vcmp.eq.s32.totalorder %v43, %v90
    %vm92 = vcmp.eq.s32.totalorder %v44, %v90
    %vm93 = vcmp.eq.s32.totalorder %v45, %v90
    %vm94 = vcmp.eq.s32.totalorder %v46, %v90
    %vm95 = vcmp.eq.s32.totalorder %v47, %v90
    %vm96 = vcmp.eq.s32.totalorder %v48, %v90
    %vm97 = vcmp.eq.s32.totalorder %v49, %v90
    %vm98 = vcmp.eq.s32.totalorder %v50, %v90
    %vm99 = vcmp.eq.s32.totalorder %v79, %v90
    %vm100 = vcmp.eq.s32.totalorder %v80, %v90
    %vm101 = vcmp.eq.s32.totalorder %v81, %v90
    %vm102 = vcmp.eq.s32.totalorder %v82, %v90
    %vm103 = vcmp.eq.s32.totalorder %v83, %v90
    %vm104 = vcmp.eq.s32.totalorder %v84, %v90
    %vm105 = vcmp.eq.s32.totalorder %v85, %v90
    %vm106 = vcmp.eq.s32.totalorder %v86, %v90
    %v107 = vsel %vm91, 1, 0
    %v108 = vsel %vm92, 1, 0
    %v109 = vsel %vm93, 1, 0
    %v110 = vsel %vm94, 1, 0
    %v111 = vsel %vm95, 1, 0
    %v112 = vsel %vm96, 1, 0
    %v113 = vsel %vm97, 1, 0
    %v114 = vsel %vm98, 1, 0
    %v115 = vsel %vm99, 1, 0
    %v116 = vsel %vm100, 1, 0
    %v117 = vsel %vm101, 1, 0
    %v118 = vsel %vm102, 1, 0
    %v119 = vsel %vm103, 1, 0
    %v120 = vsel %vm104, 1, 0
    %v121 = vsel %vm105, 1, 0
    %v122 = vsel %vm106, 1, 0
    %v123 = vcvt.s32.f32 %v107
    %v124 = vcvt.s32.f32 %v108
    %v125 = vcvt.s32.f32 %v109
    %v126 = vcvt.s32.f32 %v110
    %v127 = vcvt.s32.f32 %v111
    %v128 = vcvt.s32.f32 %v112
    %v129 = vcvt.s32.f32 %v113
    %v130 = vcvt.s32.f32 %v114
    %v131 = vcvt.s32.f32 %v115
    %v132 = vcvt.s32.f32 %v116
    %v133 = vcvt.s32.f32 %v117
    %v134 = vcvt.s32.f32 %v118
    %v135 = vcvt.s32.f32 %v119
    %v136 = vcvt.s32.f32 %v120
    %v137 = vcvt.s32.f32 %v121
    %v138 = vcvt.s32.f32 %v122
    %v139 = vld [vmem:[%s2] sm:$0xff]
    %v140 = vld [vmem:[%s2 + $0x8] sm:$0xff]
    %v141 = vld [vmem:[%s2 + $0x10] sm:$0xff]
    %v142 = vld [vmem:[%s2 + $0x18] sm:$0xff]
    %vm143 = vcmask 523264
    %v145 = vsel %vm143, %v139, 0
    %v148 = vsel %vm143, %v140, 0
    %v151 = vsel %vm143, %v141, 0
    %v154 = vsel %vm143, %v142, 0
    %156 = vmatprep.subr.mxu0 0.0
    %157 = vmatpush1.msra.mxu0 %v71
    %158 = vmatprep.subr.mxu0 0.0
    %159 = vmatpush1.msra.mxu0 %v72
    %160 = vmatprep.subr.mxu0 0.0
    %161 = vmatpush1.msra.mxu0 %v73
    %162 = vmatprep.subr.mxu0 0.0
    %163 = vmatpush1.msra.mxu0 %v74
    %164 = vmatprep.subr.mxu0 0.0
    %165 = vmatpush1.msra.mxu0 %v75
    %166 = vmatprep.subr.mxu0 0.0
    %167 = vmatpush1.msra.mxu0 %v76
    %168 = vmatprep.subr.mxu0 0.0
    %169 = vmatpush1.msra.mxu0 %v77
    %170 = vmatprep.subr.mxu0 0.0
    %171 = vmatpush1.msra.mxu0 %v78
    %172 = vmatprep.subr.mxu0 0.0
    %173 = vmatpush1.msra.mxu0 0.0
    %174 = vmatprep.subr.mxu0 0.0
    %175 = vmatpush1.msra.mxu0 0.0
    %176 = vmatprep.subr.mxu0 0.0
    %177 = vmatpush1.msra.mxu0 0.0
    %178 = vmatprep.subr.mxu0 0.0
    %179 = vmatpush1.msra.mxu0 0.0
    %180 = vmatprep.subr.mxu0 0.0
    %181 = vmatpush1.msra.mxu0 0.0
    %182 = vmatprep.subr.mxu0 0.0
    %183 = vmatpush1.msra.mxu0 0.0
    %184 = vmatprep.subr.mxu0 0.0
    %185 = vmatpush1.msra.mxu0 0.0
    %186 = vmatprep.subr.mxu0 0.0
    %187 = vmatpush1.msra.mxu0 0.0
    %188 = vmatprep.subr.mxu0 0.0
    %189 = vmatpush1.msra.mxu0 0.0
    %190 = vmatprep.subr.mxu0 0.0
    %191 = vmatpush1.msra.mxu0 0.0
    %192 = vmatprep.subr.mxu0 0.0
    %193 = vmatpush1.msra.mxu0 0.0
    %194 = vmatprep.subr.mxu0 0.0
    %195 = vmatpush1.msra.mxu0 0.0
    %196 = vmatprep.subr.mxu0 0.0
    %197 = vmatpush1.msra.mxu0 0.0
    %198 = vmatprep.subr.mxu0 0.0
    %199 = vmatpush1.msra.mxu0 0.0
    %200 = vmatprep.subr.mxu0 0.0
    %201 = vmatpush1.msra.mxu0 0.0
    %202 = vmatprep.subr.mxu0 0.0
    %203 = vmatpush1.msra.mxu0 0.0
    %204 = vmatprep.subr.mxu0 0.0
    %205 = vmatpush1.msra.mxu0 0.0
    %206 = vmatprep.subr.mxu0 0.0
    %207 = vmatpush1.msra.mxu0 0.0
    %208 = vmatprep.subr.mxu0 0.0
    %209 = vmatpush1.msra.mxu0 0.0
    %210 = vmatprep.subr.mxu0 0.0
    %211 = vmatpush1.msra.mxu0 0.0
    %212 = vmatprep.subr.mxu0 0.0
    %213 = vmatpush1.msra.mxu0 0.0
    %214 = vmatprep.subr.mxu0 0.0
    %215 = vmatpush1.msra.mxu0 0.0
    %216 = vmatprep.subr.mxu0 0.0
    %217 = vmatpush1.msra.mxu0 0.0
    %218 = vmatprep.subr.mxu0 0.0
    %219 = vmatpush1.msra.mxu0 0.0
    %220 = vmatprep.mubr.f32.mxu0 0.0
    %221 = vmatmul.mubr.f32.gmra.mrb[0].mxu0 %v145
    %v222 = vpop.f32.mrb[0].mxu0
    %v223 = vadd.f32 0.0, %v222
    %v224 = vpop.f32.mrb[0].mxu0
    %225 = vmatprep.mubr.f32.mxu0 0.0
    %226 = vmatmul.mubr.f32.gmra.mrb[0].mxu0 %v148
    %v227 = vpop.f32.mrb[0].mxu0
    %v228 = vadd.f32 0.0, %v227
    %v229 = vpop.f32.mrb[0].mxu0
    %230 = vmatprep.mubr.f32.mxu0 0.0
    %231 = vmatmul.mubr.f32.gmra.mrb[0].mxu0 %v151
    %v232 = vpop.f32.mrb[0].mxu0
    %v233 = vadd.f32 0.0, %v232
    %v234 = vpop.f32.mrb[0].mxu0
    %235 = vmatprep.mubr.f32.mxu0 0.0
    %236 = vmatmul.mubr.f32.gmra.mrb[0].mxu0 %v154
    %v237 = vpop.f32.mrb[0].mxu0
    %v238 = vadd.f32 0.0, %v237
    %v239 = vpop.f32.mrb[0].mxu0
    %240 = vdwg.mxu0
    %v241 = vld [vmem:[#allocation3] sm:$0xff]
    %v242 = vld [vmem:[#allocation3 + $0x8] sm:$0xff]
    %v243 = vld [vmem:[#allocation3 + $0x10] sm:$0xff]
    %v244 = vld [vmem:[#allocation3 + $0x18] sm:$0xff]
    %245 = vmatprep.subr.mxu0 0.0
    %246 = vmatpush1.msra.mxu0 %v123
    %247 = vmatprep.subr.mxu0 0.0
    %248 = vmatpush1.msra.mxu0 %v124
    %249 = vmatprep.subr.mxu0 0.0
    %250 = vmatpush1.msra.mxu0 %v125
    %251 = vmatprep.subr.mxu0 0.0
    %252 = vmatpush1.msra.mxu0 %v126
    %253 = vmatprep.subr.mxu0 0.0
    %254 = vmatpush1.msra.mxu0 %v127
    %255 = vmatprep.subr.mxu0 0.0
    %256 = vmatpush1.msra.mxu0 %v128
    %257 = vmatprep.subr.mxu0 0.0
    %258 = vmatpush1.msra.mxu0 %v129
    %259 = vmatprep.subr.mxu0 0.0
    %260 = vmatpush1.msra.mxu0 %v130
    %261 = vmatprep.subr.mxu0 0.0
    %262 = vmatpush1.msra.mxu0 %v131
    %263 = vmatprep.subr.mxu0 0.0
    %264 = vmatpush1.msra.mxu0 %v132
    %265 = vmatprep.subr.mxu0 0.0
    %266 = vmatpush1.msra.mxu0 %v133
    %267 = vmatprep.subr.mxu0 0.0
    %268 = vmatpush1.msra.mxu0 %v134
    %269 = vmatprep.subr.mxu0 0.0
    %270 = vmatpush1.msra.mxu0 %v135
    %271 = vmatprep.subr.mxu0 0.0
    %272 = vmatpush1.msra.mxu0 %v136
    %273 = vmatprep.subr.mxu0 0.0
    %274 = vmatpush1.msra.mxu0 %v137
    %275 = vmatprep.subr.mxu0 0.0
    %276 = vmatpush1.msra.mxu0 %v138
    %277 = vmatprep.subr.mxu0 0.0
    %278 = vmatpush1.msra.mxu0 0.0
    %279 = vmatprep.subr.mxu0 0.0
    %280 = vmatpush1.msra.mxu0 0.0
    %281 = vmatprep.subr.mxu0 0.0
    %282 = vmatpush1.msra.mxu0 0.0
    %283 = vmatprep.subr.mxu0 0.0
    %284 = vmatpush1.msra.mxu0 0.0
    %285 = vmatprep.subr.mxu0 0.0
    %286 = vmatpush1.msra.mxu0 0.0
    %287 = vmatprep.subr.mxu0 0.0
    %288 = vmatpush1.msra.mxu0 0.0
    %289 = vmatprep.subr.mxu0 0.0
    %290 = vmatpush1.msra.mxu0 0.0
    %291 = vmatprep.subr.mxu0 0.0
    %292 = vmatpush1.msra.mxu0 0.0
    %293 = vmatprep.subr.mxu0 0.0
    %294 = vmatpush1.msra.mxu0 0.0
    %295 = vmatprep.subr.mxu0 0.0
    %296 = vmatpush1.msra.mxu0 0.0
    %297 = vmatprep.subr.mxu0 0.0
    %298 = vmatpush1.msra.mxu0 0.0
    %299 = vmatprep.subr.mxu0 0.0
    %300 = vmatpush1.msra.mxu0 0.0
    %301 = vmatprep.subr.mxu0 0.0
    %302 = vmatpush1.msra.mxu0 0.0
    %303 = vmatprep.subr.mxu0 0.0
    %304 = vmatpush1.msra.mxu0 0.0
    %305 = vmatprep.subr.mxu0 0.0
    %306 = vmatpush1.msra.mxu0 0.0
    %307 = vmatprep.subr.mxu0 0.0
    %308 = vmatpush1.msra.mxu0 0.0
    %309 = vmatprep.mubr.f32.mxu0 0.0
    %310 = vmatmul.mubr.f32.gmra.mrb[0].mxu0 %v241
    %v311 = vpop.f32.mrb[0].mxu0
    %v312 = vadd.f32 0.0, %v311
    %v313 = vpop.f32.mrb[0].mxu0
    %314 = vmatprep.mubr.f32.mxu0 0.0
    %315 = vmatmul.mubr.f32.gmra.mrb[0].mxu0 %v242
    %v316 = vpop.f32.mrb[0].mxu0
    %v317 = vadd.f32 0.0, %v316
    %v318 = vpop.f32.mrb[0].mxu0
    %319 = vmatprep.mubr.f32.mxu0 0.0
    %320 = vmatmul.mubr.f32.gmra.mrb[0].mxu0 %v243
    %v321 = vpop.f32.mrb[0].mxu0
    %v322 = vadd.f32 0.0, %v321
    %v323 = vpop.f32.mrb[0].mxu0
    %324 = vmatprep.mubr.f32.mxu0 0.0
    %325 = vmatmul.mubr.f32.gmra.mrb[0].mxu0 %v244
    %v326 = vpop.f32.mrb[0].mxu0
    %v327 = vadd.f32 0.0, %v326
    %v328 = vpop.f32.mrb[0].mxu0
    %329 = vdwg.mxu0
    %v330 = vld [vmem:[%s4] sm:$0xff]
    %v331 = vld [vmem:[%s4 + $0x8] sm:$0xff]
    %v332 = vld [vmem:[%s4 + $0x10] sm:$0xff]
    %v333 = vld [vmem:[%s4 + $0x18] sm:$0xff]
    %335 = vset.pattern.permute.xlu0 0
    %336 = vperm.xlu0 %335, %v330
    %v337 = vpop.permute.xlu0 %336
    %340 = vset.pattern.permute.xlu0 0
    %341 = vperm.xlu0 %340, %v331
    %v342 = vpop.permute.xlu0 %341
    %345 = vset.pattern.permute.xlu0 0
    %346 = vperm.xlu0 %345, %v332
    %v347 = vpop.permute.xlu0 %346
    %350 = vset.pattern.permute.xlu0 0
    %351 = vperm.xlu0 %350, %v333
    %v352 = vpop.permute.xlu0 %351
    %v354 = vmul.f32 %v223, %v337
    %v355 = vmul.f32 %v228, %v342
    %v356 = vmul.f32 %v233, %v347
    %v357 = vmul.f32 %v238, %v352
    %358 = vset.pattern.permute.xlu0 1
    %359 = vperm.xlu0 %358, %v330
    %v360 = vpop.permute.xlu0 %359
    %362 = vset.pattern.permute.xlu0 1
    %363 = vperm.xlu0 %362, %v331
    %v364 = vpop.permute.xlu0 %363
    %366 = vset.pattern.permute.xlu0 1
    %367 = vperm.xlu0 %366, %v332
    %v368 = vpop.permute.xlu0 %367
    %370 = vset.pattern.permute.xlu0 1
    %371 = vperm.xlu0 %370, %v333
    %v372 = vpop.permute.xlu0 %371
    %v374 = vmul.f32 %v312, %v360
    %v375 = vmul.f32 %v317, %v364
    %v376 = vmul.f32 %v322, %v368
    %v377 = vmul.f32 %v327, %v372
    %v378 = vadd.f32 %v354, %v374
    %v379 = vadd.f32 %v355, %v375
    %v380 = vadd.f32 %v356, %v376
    %v381 = vadd.f32 %v357, %v377
    %v382 = vadd.f32 %v378, %v379
    %v383 = vadd.f32 %v382, %v380
    %v384 = vadd.f32 %v383, %v381
    %v385 = vrot.slane %v384, 4
    %v386 = vadd.f32 %v384, %v385
    %v387 = vrot.slane %v386, 2
    %v388 = vadd.f32 %v386, %v387
    %v389 = vrot.slane %v388, 1
    %v390 = vadd.f32 %v388, %v389
    %v391 = vld [vmem:[#allocation2] sm:$0x1]
    %393 = vset.pattern.permute.xlu0 0
    %394 = vperm.xlu0 %393, %v391
    %v395 = vpop.permute.xlu0 %394
    %v397 = vlaneseq
    %v398 = vshrl.u32 %v397, 7
    %v399 = vsub.s32 0, %v398
    %v400 = vrot.slane %v395, %v399
    %v401 = vadd.f32 %v390, %v400
    %402 = vst [vmem:[#allocation6] sm:$0x1] %v401
    // Predicated region
    $region30: #{tpu_custom_call.1} parent=1 // pred_check
      _
    $region31: #{tpu_custom_call.1} parent=1 // pred_check_branch
      %404 = sbr.rel (0) target = $region33
    $region32: #{tpu_custom_call.1} parent=1 // pred_region
      %s406 = ssub.s32 16, 16
      %407 = vsyncadd [#allocation5], %s406
      %s409 = sshll.u32 [#allocation6], 4
      %s410 = int_to_ptr.vmem [resolvable:$true] %s409
      %412 = dma.vmem_to_hbm [thread:$0]  %s410, 16, %s6, [#allocation5]
    $region33: #{tpu_custom_call.1} parent=1 // pred_fallthru
      _
    // Predicated region
    $region34: #{tpu_custom_call.1} parent=1 // pred_check
      _
    $region35: #{tpu_custom_call.1} parent=1 // pred_check_branch
      %414 = sbr.rel (0) target = $region37
    $region36: #{tpu_custom_call.1} parent=1 // pred_region
      %415 = dma.done [#allocation5], 16
    $region37: #{tpu_custom_call.1} parent=1 // pred_fallthru
      _
    %416 = vsyncpa [#allocation4], 1
    %417 = vsyncpa [#allocation5], 1

</llo_original>
